<compile_context>
chip_gen: v7x
topology: tpu7x:2x2x1
jax: 0.10.0
libtpu: 0.0.40
codegen_flags: <defaults>
</compile_context>

<pallas_src>
import jax
import jax.numpy as jnp
from jax.experimental import pallas as pl
from jax.experimental.pallas import tpu as pltpu


# ----------------------------------------------------------------------------
# helpers
# ----------------------------------------------------------------------------
def _vmem_cap_bytes():
    try:
        info = pltpu.get_tpu_info()
        cap = getattr(info, "vmem_capacity_bytes", None)
        if cap:
            return int(cap)
    except Exception:
        pass
    return 64 << 20          # conservative default (v7x-sized)


_VMEM_CAP = _vmem_cap_bytes()


def _vmem_limit(block_bytes):
    """2x (double buffering) + headroom, never above ~75% of physical VMEM."""
    want = 2 * block_bytes + (4 << 20)
    return int(min(max(want, 32 << 20), int(0.75 * _VMEM_CAP)))


def _div_tile(n, step, max_t):
    """Largest multiple-of-`step` divisor of n that is <= max_t (else n)."""
    best = n
    for d in range(step, min(n, max_t) + 1, step):
        if n % d == 0:
            best = d
    return best


def _row_tile(n, max_rows=512):
    return _div_tile(n, 8, max_rows)


def _col_tile(n, max_cols=512):
    return _div_tile(n, 128, max_cols)


# ----------------------------------------------------------------------------
# Row-tiled LayerNorm kernel (embedding LN and final ln_f)
# ----------------------------------------------------------------------------
def _ln_kernel(eps):
    def kernel(x_ref, w_ref, b_ref, o_ref):
        x = x_ref[...].astype(jnp.float32)
        mu = jnp.mean(x, axis=-1, keepdims=True)
        var = jnp.mean((x - mu) ** 2, axis=-1, keepdims=True)
        y = (x - mu) * jax.lax.rsqrt(var + eps) * w_ref[...] + b_ref[...]
        o_ref[...] = y.astype(o_ref.dtype)
    return kernel


def layernorm_rows(x2d, w, b, eps, out_dtype, *, max_rows=512):
    N, H = x2d.shape
    rt = _row_tile(N, max_rows)
    itin = jnp.dtype(x2d.dtype).itemsize
    itout = jnp.dtype(out_dtype).itemsize
    limit = _vmem_limit(rt * H * (itin + itout + 4) + 2 * H * 4)
    return pl.pallas_call(
        _ln_kernel(eps),
        out_shape=jax.ShapeDtypeStruct((N, H), out_dtype),
        grid_spec=pltpu.PrefetchScalarGridSpec(
            num_scalar_prefetch=0,
            grid=(N // rt,),
            in_specs=[
                pl.BlockSpec((rt, H), lambda r: (r, 0)),
                pl.BlockSpec((1, H), lambda r: (0, 0)),
                pl.BlockSpec((1, H), lambda r: (0, 0)),
            ],
            out_specs=pl.BlockSpec((rt, H), lambda r: (r, 0)),
        ),
        compiler_params=pltpu.CompilerParams(
            dimension_semantics=("parallel",), vmem_limit_bytes=limit),
    )(x2d, w, b)


# ----------------------------------------------------------------------------
# QKV projection kernel: LN1 -> per-head fused QKV -> q,k,v in (B,nh,S,hd) bf16
# grid = (batch, seq tiles, head); LN computed once per (b, s-tile) at h == 0
# into a bf16 VMEM scratch and reused across heads.  q is pre-scaled on host.
# ----------------------------------------------------------------------------
def _qkv_kernel(eps):
    def kernel(h_ref, ln_w, ln_b, w_ref, b_ref, q_ref, k_ref, v_ref, ln_s):
        h = pl.program_id(2)

        @pl.when(h == 0)
        def _():
            x = h_ref[0].astype(jnp.float32)                     # (ts, H)
            mu = jnp.mean(x, axis=-1, keepdims=True)
            var = jnp.mean((x - mu) ** 2, axis=-1, keepdims=True)
            ln = (x - mu) * jax.lax.rsqrt(var + eps) * ln_w[...] + ln_b[...]
            ln_s[...] = ln.astype(jnp.bfloat16)

        hd = q_ref.shape[-1]
        qkv = jnp.dot(ln_s[...], w_ref[0],
                      preferred_element_type=jnp.float32) + b_ref[0]  # (ts, 3hd)
        q_ref[0, 0] = qkv[:, :hd].astype(jnp.bfloat16)
        k_ref[0, 0] = qkv[:, hd:2 * hd].astype(jnp.bfloat16)
        v_ref[0, 0] = qkv[:, 2 * hd:].astype(jnp.bfloat16)
    return kernel


def bloom_qkv(hidden, lp, n_head, eps, *, max_rows=1024):
    B, S, H = hidden.shape
    hd = H // n_head
    ts = _row_tile(S, max_rows)

    block_bytes = (ts * H * 2 * 2                    # hidden block + ln scratch (bf16)
                   + H * 3 * hd * 2 + 3 * hd * 4     # per-head weight + bias
                   + ts * 3 * hd * 4                 # f32 qkv temporary
                   + 3 * ts * hd * 2                 # q/k/v output blocks
                   + 2 * H * 4)
    limit = _vmem_limit(block_bytes)

    kv_shape = jax.ShapeDtypeStruct((B, n_head, S, hd), jnp.bfloat16)
    return pl.pallas_call(
        _qkv_kernel(eps),
        out_shape=(kv_shape, kv_shape, kv_shape),
        grid_spec=pltpu.PrefetchScalarGridSpec(
            num_scalar_prefetch=0,
            grid=(B, S // ts, n_head),
            in_specs=[
                pl.BlockSpec((1, ts, H), lambda b, s, h: (b, s, 0)),        # hidden
                pl.BlockSpec((1, H), lambda b, s, h: (0, 0)),               # ln1 w
                pl.BlockSpec((1, H), lambda b, s, h: (0, 0)),               # ln1 b
                pl.BlockSpec((1, H, 3 * hd), lambda b, s, h: (h, 0, 0)),    # qkv w (head)
                pl.BlockSpec((1, 1, 3 * hd), lambda b, s, h: (h, 0, 0)),    # qkv b (head)
            ],
            out_specs=(
                pl.BlockSpec((1, 1, ts, hd), lambda b, s, h: (b, h, s, 0)),
                pl.BlockSpec((1, 1, ts, hd), lambda b, s, h: (b, h, s, 0)),
                pl.BlockSpec((1, 1, ts, hd), lambda b, s, h: (b, h, s, 0)),
            ),
            scratch_shapes=[pltpu.VMEM((ts, H), jnp.bfloat16)],
        ),
        compiler_params=pltpu.CompilerParams(
            dimension_semantics=("parallel", "parallel", "arbitrary"),
            vmem_limit_bytes=limit),
    )(hidden, lp["ln1_w"], lp["ln1_b"], lp["qkv_w3"], lp["qkv_b3"])


# ----------------------------------------------------------------------------
# Attention core kernel: scores -> softmax (f32) -> context, query-row tiled.
# grid = (batch, head, q tiles); q is already scaled by 1/sqrt(hd);
# bias = alibi + padding (host-folded); causal built per (tq, S) tile.
# ----------------------------------------------------------------------------
def _attn_core_kernel(tq):
    def kernel(q_ref, k_ref, v_ref, bias_ref, ctx_ref):
        q = q_ref[0, 0]                                           # (tq, hd) bf16
        k = k_ref[0, 0]                                           # (S, hd) bf16
        v = v_ref[0, 0]                                           # (S, hd) bf16
        S = k.shape[0]

        # contract last axes directly: no explicit transpose of k
        scores = jax.lax.dot_general(
            q, k, (((1,), (1,)), ((), ())),
            preferred_element_type=jnp.float32)                   # (tq, S)

        row0 = pl.program_id(2) * tq
        qpos = row0 + jax.lax.broadcasted_iota(jnp.int32, (tq, S), 0)
        kpos = jax.lax.broadcasted_iota(jnp.int32, (tq, S), 1)
        causal = jnp.where(kpos > qpos, -10000.0, 0.0)

        scores = scores + bias_ref[0, 0] + causal
        scores = scores - jnp.max(scores, axis=-1, keepdims=True)
        p = jnp.exp(scores)
        p = p / jnp.sum(p, axis=-1, keepdims=True)                # exact, as reference

        ctx = jnp.dot(p.astype(jnp.bfloat16), v,
                      preferred_element_type=jnp.float32)         # (tq, hd)
        ctx_ref[0, 0] = ctx.astype(jnp.bfloat16)
    return kernel


def bloom_attn_core(q, k, v, bias, *, max_q=256):
    B, nh, S, hd = q.shape
    tq = _row_tile(S, max_q)

    block_bytes = (tq * hd * 2 + 2 * S * hd * 2 + S * 4
                   + 3 * tq * S * 4                    # score / prob temporaries
                   + tq * hd * 2)
    limit = _vmem_limit(block_bytes)

    return pl.pallas_call(
        _attn_core_kernel(tq),
        out_shape=jax.ShapeDtypeStruct((B, nh, S, hd), jnp.bfloat16),
        grid_spec=pltpu.PrefetchScalarGridSpec(
            num_scalar_prefetch=0,
            grid=(B, nh, S // tq),
            in_specs=[
                pl.BlockSpec((1, 1, tq, hd), lambda b, h, qi: (b, h, qi, 0)),  # q
                pl.BlockSpec((1, 1, S, hd), lambda b, h, qi: (b, h, 0, 0)),    # k
                pl.BlockSpec((1, 1, S, hd), lambda b, h, qi: (b, h, 0, 0)),    # v
                pl.BlockSpec((1, 1, 1, S), lambda b, h, qi: (b, h, 0, 0)),     # bias
            ],
            out_specs=pl.BlockSpec((1, 1, tq, hd), lambda b, h, qi: (b, h, qi, 0)),
        ),
        compiler_params=pltpu.CompilerParams(
            dimension_semantics=("parallel", "parallel", "parallel"),
            vmem_limit_bytes=limit),
    )(q, k, v, bias)


# ----------------------------------------------------------------------------
# Dense projection + bias + residual: rows x cols matmul over (B*S, H) rows,
# so dense_w is streamed per row tile (not per batch-element per head).
# ----------------------------------------------------------------------------
def _dense_kernel():
    def kernel(x_ref, w_ref, b_ref, res_ref, o_ref):
        acc = jnp.dot(x_ref[...], w_ref[...], preferred_element_type=jnp.float32)
        o_ref[...] = (acc + b_ref[...]
                      + res_ref[...].astype(jnp.float32)).astype(o_ref.dtype)
    return kernel


def bloom_dense_residual(ctx2d, w, b, res2d, *, max_rows=512, max_cols=512):
    N, H = ctx2d.shape
    Ho = w.shape[1]
    rt = _row_tile(N, max_rows)
    ct = _col_tile(Ho, max_cols)

    block_bytes = (rt * H * 2 + H * ct * 2 + ct * 4
                   + rt * ct * 2 * 2 + rt * ct * 4)
    limit = _vmem_limit(block_bytes)

    return pl.pallas_call(
        _dense_kernel(),
        out_shape=jax.ShapeDtypeStruct((N, Ho), jnp.bfloat16),
        grid_spec=pltpu.PrefetchScalarGridSpec(
            num_scalar_prefetch=0,
            grid=(N // rt, Ho // ct),
            in_specs=[
                pl.BlockSpec((rt, H), lambda r, c: (r, 0)),     # ctx rows
                pl.BlockSpec((H, ct), lambda r, c: (0, c)),     # dense w chunk
                pl.BlockSpec((1, ct), lambda r, c: (0, c)),     # dense b chunk
                pl.BlockSpec((rt, ct), lambda r, c: (r, c)),    # residual
            ],
            out_specs=pl.BlockSpec((rt, ct), lambda r, c: (r, c)),
        ),
        compiler_params=pltpu.CompilerParams(
            dimension_semantics=("parallel", "parallel"),
            vmem_limit_bytes=limit),
    )(ctx2d, w, b, res2d)


# ----------------------------------------------------------------------------
# MLP block kernel: LN2 -> dense_h_to_4h -> gelu -> dense_4h_to_h -> residual
# grid = (row tiles, ffn tiles); ffn axis is a reduction with a f32 accumulator;
# LN scratch is bf16 and written once per row tile.
# ----------------------------------------------------------------------------
def _mlp_kernel(eps):
    def kernel(x_ref, ln_w, ln_b, w1_ref, b1_ref, w2_ref, b2_ref,
               o_ref, ln_s, acc_s):
        f = pl.program_id(1)

        @pl.when(f == 0)
        def _():
            x = x_ref[...].astype(jnp.float32)
            mu = jnp.mean(x, axis=-1, keepdims=True)
            var = jnp.mean((x - mu) ** 2, axis=-1, keepdims=True)
            ln = (x - mu) * jax.lax.rsqrt(var + eps) * ln_w[...] + ln_b[...]
            ln_s[...] = ln.astype(jnp.bfloat16)
            acc_s[...] = jnp.zeros_like(acc_s)

        h1 = jnp.dot(ln_s[...], w1_ref[...],
                     preferred_element_type=jnp.float32) + b1_ref[...]
        # exact gelu constants from FastBloomMLP
        g = h1 * 0.5 * (1.0 + jnp.tanh(0.79788456 * h1 * (1.0 + 0.044715 * h1 * h1)))
        acc_s[...] += jnp.dot(g.astype(jnp.bfloat16), w2_ref[...],
                              preferred_element_type=jnp.float32)

        @pl.when(f == pl.num_programs(1) - 1)
        def _():
            o_ref[...] = (acc_s[...] + b2_ref[...]
                          + x_ref[...].astype(jnp.float32)).astype(o_ref.dtype)
    return kernel


def bloom_mlp(attn2d, lp, eps, *, max_rows=512, max_ffn=512):
    N, H = attn2d.shape
    H4 = 4 * H
    rt = _row_tile(N, max_rows)
    ft = _col_tile(H4, max_ffn)

    block_bytes = (rt * H * 2 * 2                     # x in + out (bf16)
                   + H * ft * 2 + ft * 4 + ft * H * 2 + H * 4
                   + rt * ft * 4                      # h1 / gelu temporary
                   + rt * H * 2 + rt * H * 4          # bf16 ln scratch + f32 acc
                   + 2 * H * 4)
    limit = _vmem_limit(block_bytes)

    return pl.pallas_call(
        _mlp_kernel(eps),
        out_shape=jax.ShapeDtypeStruct((N, H), jnp.bfloat16),
        grid_spec=pltpu.PrefetchScalarGridSpec(
            num_scalar_prefetch=0,
            grid=(N // rt, H4 // ft),
            in_specs=[
                pl.BlockSpec((rt, H), lambda r, f: (r, 0)),     # attn residual
                pl.BlockSpec((1, H), lambda r, f: (0, 0)),      # ln2 w
                pl.BlockSpec((1, H), lambda r, f: (0, 0)),      # ln2 b
                pl.BlockSpec((H, ft), lambda r, f: (0, f)),     # w1 chunk
                pl.BlockSpec((1, ft), lambda r, f: (0, f)),     # b1 chunk
                pl.BlockSpec((ft, H), lambda r, f: (f, 0)),     # w2 chunk
                pl.BlockSpec((1, H), lambda r, f: (0, 0)),      # b2
            ],
            out_specs=pl.BlockSpec((rt, H), lambda r, f: (r, 0)),
            scratch_shapes=[pltpu.VMEM((rt, H), jnp.bfloat16),
                            pltpu.VMEM((rt, H), jnp.float32)],
        ),
        compiler_params=pltpu.CompilerParams(
            dimension_semantics=("parallel", "arbitrary"),
            vmem_limit_bytes=limit),
    )(attn2d, lp["ln2_w"], lp["ln2_b"], lp["mlp_w1"], lp["mlp_b1"],
      lp["mlp_w2"], lp["mlp_b2"])


# ----------------------------------------------------------------------------
# One-time parameter packing (weights to bf16, per-head qkv layout, q pre-scale)
# ----------------------------------------------------------------------------
def prepare_params(raw, n_head):
    H = raw["word_embeddings"].shape[1]
    hd = H // n_head
    inv_norm = 1.0 / (float(hd) ** 0.5)

    packed = {
        "word_embeddings": raw["word_embeddings"],
        "emb_ln_w": raw["emb_ln_w"].reshape(1, H),
        "emb_ln_b": raw["emb_ln_b"].reshape(1, H),
        "lnf_w": raw["lnf_w"].reshape(1, H),
        "lnf_b": raw["lnf_b"].reshape(1, H),
        "layers": [],
    }
    for lp in raw["layers"]:
        w3 = lp["qkv_w"].reshape(H, n_head, 3 * hd).transpose(1, 0, 2)   # (nh,H,3hd)
        b3 = lp["qkv_b"].reshape(n_head, 1, 3 * hd)
        # fold the 1/sqrt(head_dim) score scale into the q slice
        w3 = w3.at[:, :, :hd].multiply(inv_norm)
        b3 = b3.at[:, :, :hd].multiply(inv_norm)
        packed["layers"].append({
            "ln1_w": lp["ln1_w"].reshape(1, H),
            "ln1_b": lp["ln1_b"].reshape(1, H),
            "qkv_w3": w3.astype(jnp.bfloat16),
            "qkv_b3": b3.astype(jnp.float32),
            "dense_w": lp["dense_w"].astype(jnp.bfloat16),
            "dense_b": lp["dense_b"].reshape(1, H).astype(jnp.float32),
            "ln2_w": lp["ln2_w"].reshape(1, H),
            "ln2_b": lp["ln2_b"].reshape(1, H),
            "mlp_w1": lp["mlp_w1"].astype(jnp.bfloat16),
            "mlp_b1": lp["mlp_b1"].reshape(1, 4 * H).astype(jnp.float32),
            "mlp_w2": lp["mlp_w2"].astype(jnp.bfloat16),
            "mlp_b2": lp["mlp_b2"].reshape(1, H).astype(jnp.float32),
        })
    return packed


# ----------------------------------------------------------------------------
# Model glue (embedding gather, alibi+pad bias, layer loop)
# ----------------------------------------------------------------------------
def build_alibi_pad_bias(attention_mask, n_head):
    positions = attention_mask * (jnp.cumsum(attention_mask, axis=1) - 1.0)    # (B,S)
    freq = 1.0 + jnp.arange(n_head, dtype=jnp.float32)
    slopes = 2.0 ** (-8.0 * freq / n_head)
    alibi = slopes[None, :, None] * positions[:, None, :]                      # (B,nh,S)
    pad = -10000.0 * (1.0 - attention_mask)[:, None, :]                        # (B,1,S)
    return (alibi + pad)[:, :, None, :].astype(jnp.float32)                    # (B,nh,1,S)


def fast_bloom_forward(params, input_ids, attention_mask, cfg):
    B, S = input_ids.shape
    H, n_head, n_layer, eps = cfg["hidden"], cfg["n_head"], cfg["n_layer"], cfg["eps"]
    N = B * S
    # bigger row tiles on 128-MiB-VMEM chips (v5e/v6e), smaller on v7x
    big_rows = 1024 if _VMEM_CAP >= (96 << 20) else 512

    # TODO(synk): embedding gather stays in plain JAX glue (data-dependent gather).
    emb = params["word_embeddings"][input_ids].reshape(N, H)
    hidden = layernorm_rows(emb, params["emb_ln_w"], params["emb_ln_b"], eps,
                            jnp.bfloat16).reshape(B, S, H)

    bias = build_alibi_pad_bias(attention_mask.astype(jnp.float32), n_head)

    # TODO(synk): past_key_values (KV-cache concat) not implemented; prefill only.
    # TODO(synk): apply_residual_connection_post_layernorm=True path not implemented.
    presents = []
    for i in range(n_layer):
        lp = params["layers"][i]
        # layer_number = max(1, i) cancels algebraically in the score math.
        q, k, v = bloom_qkv(hidden, lp, n_head, eps)
        ctx = bloom_attn_core(q, k, v, bias)                      # (B,nh,S,hd) bf16
        presents.append((k, v))
        # head-merge is pure layout plumbing: leave the transpose to XLA
        ctx2d = ctx.transpose(0, 2, 1, 3).reshape(N, H)
        attn = bloom_dense_residual(ctx2d, lp["dense_w"], lp["dense_b"],
                                    hidden.reshape(N, H), max_rows=big_rows)
        hidden = bloom_mlp(attn, lp, eps, max_rows=big_rows).reshape(B, S, H)

    out = layernorm_rows(hidden.reshape(N, H), params["lnf_w"], params["lnf_b"],
                         eps, jnp.float32).reshape(B, S, H)
    return out, presents


# ----------------------------------------------------------------------------
# Deterministic (raw, torch-like) parameter initialization
# ----------------------------------------------------------------------------
def init_params(key, vocab, H, n_head, n_layer):
    def normal(k, shape, scale=0.02):
        return (scale * jax.random.normal(k, shape)).astype(jnp.float32)

    keys = jax.random.split(key, 2 + 7 * n_layer)
    params = {
        "word_embeddings": normal(keys[0], (vocab, H), 1.0),
        "emb_ln_w": jnp.ones((H,), jnp.float32),
        "emb_ln_b": jnp.zeros((H,), jnp.float32),
        "lnf_w": jnp.ones((H,), jnp.float32),
        "lnf_b": jnp.zeros((H,), jnp.float32),
        "layers": [],
    }
    kidx = 2
    for _ in range(n_layer):
        lk = keys[kidx:kidx + 7]
        kidx += 7
        params["layers"].append({
            "ln1_w": jnp.ones((H,), jnp.float32),
            "ln1_b": jnp.zeros((H,), jnp.float32),
            # stored as (in, out) so kernels do x @ W  (== torch x @ W.T)
            "qkv_w": normal(lk[0], (H, 3 * H)),
            "qkv_b": normal(lk[1], (3 * H,)),
            "dense_w": normal(lk[2], (H, H)),
            "dense_b": normal(lk[3], (H,)),
            "ln2_w": jnp.ones((H,), jnp.float32),
            "ln2_b": jnp.zeros((H,), jnp.float32),
            "mlp_w1": normal(lk[4], (H, 4 * H)),
            "mlp_b1": normal(lk[5], (4 * H,)),
            "mlp_w2": normal(lk[6], (4 * H, H)),
            "mlp_b2": jnp.zeros((H,), jnp.float32),
        })
    return params


# ----------------------------------------------------------------------------
if __name__ == "__main__":
    cfg = {"vocab": 64, "hidden": 32, "n_head": 4, "n_layer": 2,
           "seq": 8, "batch": 2, "eps": 1e-5}

    key = jax.random.PRNGKey(0)
    pkey, ikey = jax.random.split(key)
    raw_params = init_params(pkey, cfg["vocab"], cfg["hidden"],
                             cfg["n_head"], cfg["n_layer"])
    params = prepare_params(raw_params, cfg["n_head"])   # one-time packing

    input_ids = jax.random.randint(ikey, (cfg["batch"], cfg["seq"]), 0, cfg["vocab"])
    attention_mask = jnp.ones((cfg["batch"], cfg["seq"]), jnp.float32)
    attention_mask = attention_mask.at[1, :2].set(0.0)    # some padded positions

    out, presents = fast_bloom_forward(params, input_ids, attention_mask, cfg)
    out = jax.block_until_ready(out)
    for k, v in presents:
        jax.block_until_ready(k)
        jax.block_until_ready(v)

    hd = cfg["hidden"] // cfg["n_head"]
    assert out.shape == (cfg["batch"], cfg["seq"], cfg["hidden"])
    assert presents[0][0].shape == (cfg["batch"], cfg["n_head"], cfg["seq"], hd)
    assert jnp.all(jnp.isfinite(out))
    print("KERNEL_OK")
</pallas_src>

<mosaic_0001>
module attributes {stable_mosaic.version = 11 : i64} {
  func.func @kernel(%arg0: i32, %arg1: memref<16x32xf32, #tpu.memory_space<vmem>>, %arg2: memref<1x32xf32, #tpu.memory_space<vmem>>, %arg3: memref<1x32xf32, #tpu.memory_space<vmem>>, %arg4: memref<16x32xbf16, #tpu.memory_space<vmem>>) attributes {dimension_semantics = [#tpu.dimension_semantics<parallel>], iteration_bounds = array<i64: 1>, scalar_prefetch = 0 : i64, scratch_operands = 0 : i64, tpu.core_type = #tpu.core_type<tc>, window_params = [{transform_indices = @transform_0, window_bounds = array<i64: 16, 32>}, {pipeline_mode = #tpu.pipeline_mode<synchronous>, transform_indices = @transform_1, window_bounds = array<i64: 1, 32>}, {pipeline_mode = #tpu.pipeline_mode<synchronous>, transform_indices = @transform_2, window_bounds = array<i64: 1, 32>}, {transform_indices = @transform_3, window_bounds = array<i64: 16, 32>}]} {
    %c0 = arith.constant 0 : index
    %c0_0 = arith.constant 0 : index
    %0 = vector.load %arg1[%c0, %c0_0] : memref<16x32xf32, #tpu.memory_space<vmem>>, vector<16x32xf32>
    %cst = arith.constant dense<0.000000e+00> : vector<16xf32>
    %1 = vector.multi_reduction <add>, %0, %cst [1] : vector<16x32xf32> to vector<16xf32>
    %2 = vector.shape_cast %1 : vector<16xf32> to vector<16x1xf32>
    %cst_1 = arith.constant 3.200000e+01 : f32
    %3 = vector.broadcast %cst_1 : f32 to vector<16x1xf32>
    %4 = arith.divf %2, %3 : vector<16x1xf32>
    %5 = vector.broadcast %4 : vector<16x1xf32> to vector<16x32xf32>
    %6 = arith.subf %0, %5 : vector<16x32xf32>
    %7 = arith.mulf %6, %6 : vector<16x32xf32>
    %cst_2 = arith.constant dense<0.000000e+00> : vector<16xf32>
    %8 = vector.multi_reduction <add>, %7, %cst_2 [1] : vector<16x32xf32> to vector<16xf32>
    %9 = vector.shape_cast %8 : vector<16xf32> to vector<16x1xf32>
    %cst_3 = arith.constant 3.200000e+01 : f32
    %10 = vector.broadcast %cst_3 : f32 to vector<16x1xf32>
    %11 = arith.divf %9, %10 : vector<16x1xf32>
    %12 = vector.broadcast %4 : vector<16x1xf32> to vector<16x32xf32>
    %13 = arith.subf %0, %12 : vector<16x32xf32>
    %cst_4 = arith.constant 9.99999974E-6 : f32
    %14 = vector.broadcast %cst_4 : f32 to vector<16x1xf32>
    %15 = arith.addf %11, %14 : vector<16x1xf32>
    %16 = math.rsqrt %15 : vector<16x1xf32>
    %17 = vector.broadcast %16 : vector<16x1xf32> to vector<16x32xf32>
    %18 = arith.mulf %13, %17 : vector<16x32xf32>
    %c0_5 = arith.constant 0 : index
    %c0_6 = arith.constant 0 : index
    %19 = vector.load %arg2[%c0_5, %c0_6] : memref<1x32xf32, #tpu.memory_space<vmem>>, vector<1x32xf32>
    %20 = vector.broadcast %19 : vector<1x32xf32> to vector<16x32xf32>
    %21 = arith.mulf %18, %20 : vector<16x32xf32>
    %c0_7 = arith.constant 0 : index
    %c0_8 = arith.constant 0 : index
    %22 = vector.load %arg3[%c0_7, %c0_8] : memref<1x32xf32, #tpu.memory_space<vmem>>, vector<1x32xf32>
    %23 = vector.broadcast %22 : vector<1x32xf32> to vector<16x32xf32>
    %24 = arith.addf %21, %23 : vector<16x32xf32>
    %25 = arith.truncf %24 : vector<16x32xf32> to vector<16x32xbf16>
    %c0_9 = arith.constant 0 : index
    %c0_10 = arith.constant 0 : index
    %26 = vector.load %arg4[%c0_9, %c0_10] : memref<16x32xbf16, #tpu.memory_space<vmem>>, vector<16x32xbf16>
    tpu.vector_store %arg4[%c0_9, %c0_10], %25 {strides = array<i32>} : memref<16x32xbf16, #tpu.memory_space<vmem>>, vector<16x32xbf16>,
    return
  }
  func.func @transform_0(%arg0: i32) -> (i32, i32) {
    %c0_i32 = arith.constant 0 : i32
    %c0_i32_0 = arith.constant 0 : i32
    return %arg0, %c0_i32 : i32, i32
  }
  func.func @transform_1(%arg0: i32) -> (i32, i32) {
    %c0_i32 = arith.constant 0 : i32
    %c0_i32_0 = arith.constant 0 : i32
    %c0_i32_1 = arith.constant 0 : i32
    return %c0_i32, %c0_i32_0 : i32, i32
  }
  func.func @transform_2(%arg0: i32) -> (i32, i32) {
    %c0_i32 = arith.constant 0 : i32
    %c0_i32_0 = arith.constant 0 : i32
    %c0_i32_1 = arith.constant 0 : i32
    return %c0_i32, %c0_i32_0 : i32, i32
  }
  func.func @transform_3(%arg0: i32) -> (i32, i32) {
    %c0_i32 = arith.constant 0 : i32
    %c0_i32_0 = arith.constant 0 : i32
    return %arg0, %c0_i32 : i32, i32
  }
}

</mosaic_0001>

<llo_original>
// kernel: tpu_custom_call.1
$region0: #{tpu_custom_call.1}
  #allocation0 [shape = 'u32[]', space=smem, size = 0x4, offset = 0x4, fixed_abs, tag = 'smem constant byte address 0x4 - core index']
  #allocation1 [shape = 'u32[144,128]{1,0:T(1,128)}', space=vmem, size = 0x12000, scoped, tag = 'internal scratch']
  %s0 = inlined_call_operand.hbm [shape: f32[16,32], index: 0, kind: input, shape index: {}]
  %s1 = inlined_call_operand.vmem [shape: f32[1,32], index: 1, kind: input, shape index: {}]
  %s2 = inlined_call_operand.vmem [shape: f32[1,32], index: 2, kind: input, shape index: {}]
  %s3 = inlined_call_operand.hbm [shape: bf16[16,32], index: 3, kind: output, shape index: {}]
  %s4 = sld [smem:[#allocation0]]
  $region26: #{tpu_custom_call.1} parent=0
    _
  %s6 = ssub.s32 1, %s4
  %s7 = scalar_select 0, %s6, %s4
  $region1: #{tpu_custom_call.1} parent=0
    #allocation2 [shape = 'u8[8192]{0}', space=vmem, size = 0x2000, scoped, tag = 'input window, operand 0, single buffered']
    #allocation3 [shape = 's32[1]{0}', space=sflag, size = 0x4, scoped, tag = 'scoped memory for tpu_custom_call.1']
    #allocation4 [shape = 's32[1]{0}', space=sflag, size = 0x4, scoped, tag = 'scoped memory for tpu_custom_call.1']
    #allocation5 [shape = 'u8[4096]{0}', space=vmem, size = 0x1000, scoped, tag = 'output window, operand 0, single buffered']
    %8 = vsyncpa [#allocation3], 0
    %9 = vsyncpa [#allocation4], 0
    // Predicated region
    $region2: #{tpu_custom_call.1} parent=1 // pred_check
      _
    $region3: #{tpu_custom_call.1} parent=1 // pred_check_branch
      %11 = sbr.rel (0) target = $region5
    $region4: #{tpu_custom_call.1} parent=1 // pred_region
      %s13 = ssub.s32 256, 256
      %14 = vsyncadd [#allocation3], %s13
      %s15 = sshll.u32 [#allocation2], 4
      %s16 = int_to_ptr.vmem [resolvable:$true] %s15
      %21 = dma.hbm_to_vmem [thread:$0]  %s0, 256, %s16, [#allocation3], 128, 128, 8
    $region5: #{tpu_custom_call.1} parent=1 // pred_fallthru
      _
    // Predicated region
    $region6: #{tpu_custom_call.1} parent=1 // pred_check
      _
    $region7: #{tpu_custom_call.1} parent=1 // pred_check_branch
      %23 = sbr.rel (0) target = $region9
    $region8: #{tpu_custom_call.1} parent=1 // pred_region
      _
    $region9: #{tpu_custom_call.1} parent=1 // pred_fallthru
      _
    // Predicated region
    $region10: #{tpu_custom_call.1} parent=1 // pred_check
      _
    $region11: #{tpu_custom_call.1} parent=1 // pred_check_branch
      %25 = sbr.rel (0) target = $region13
    $region12: #{tpu_custom_call.1} parent=1 // pred_region
      _
    $region13: #{tpu_custom_call.1} parent=1 // pred_fallthru
      _
    // Predicated region
    $region14: #{tpu_custom_call.1} parent=1 // pred_check
      _
    $region15: #{tpu_custom_call.1} parent=1 // pred_check_branch
      %27 = sbr.rel (0) target = $region17
    $region16: #{tpu_custom_call.1} parent=1 // pred_region
      %28 = dma.done [#allocation3], 256
    $region17: #{tpu_custom_call.1} parent=1 // pred_fallthru
      _
    %v29 = vld [vmem:[#allocation2] sm:$0xff]
    %v30 = vld [vmem:[#allocation2 + $0x8] sm:$0xff]
    %vm31 = vcmask 261120
    %v32 = vsel %vm31, %v29, 0.0
    %33 = vadd.xlane.f32.xlu0 %v32
    %v34 = vpop.xlane.xlu0 %33
    %v35 = vsel %vm31, %v30, 0.0
    %36 = vadd.xlane.f32.xlu0 %v35
    %v37 = vpop.xlane.xlu0 %36
    %v38 = vrcp.pop 32.0
    %v39 = vmul.f32 %v34, %v38
    %v40 = vmul.f32 %v37, %v38
    %v41 = vsub.f32 %v29, %v39
    %v42 = vsub.f32 %v30, %v40
    %v43 = vmul.f32 %v41, %v41
    %v44 = vmul.f32 %v42, %v42
    %v45 = vsel %vm31, %v43, 0.0
    %46 = vadd.xlane.f32.xlu0 %v45
    %v47 = vpop.xlane.xlu0 %46
    %v48 = vsel %vm31, %v44, 0.0
    %49 = vadd.xlane.f32.xlu0 %v48
    %v50 = vpop.xlane.xlu0 %49
    %v51 = vmul.f32 %v47, %v38
    %v52 = vmul.f32 %v50, %v38
    %v53 = vadd.f32 %v51, 1e-05
    %v54 = vadd.f32 %v52, 1e-05
    %v55 = vrsqrt.pop %v53
    %v56 = vrsqrt.pop %v54
    %v57 = vmul.f32 %v41, %v55
    %v58 = vmul.f32 %v42, %v56
    %v59 = vld [vmem:[%s1] sm:$0x1]
    %v61 = vlaneseq
    %v62 = vshrl.u32 %v61, 7
    %v63 = vsub.s32 0, %v62
    %v64 = vrot.slane %v59, %v63
    %v66 = vmul.f32 %v57, %v64
    %v67 = vmul.f32 %v58, %v64
    %v68 = vld [vmem:[%s2] sm:$0x1]
    %v70 = vlaneseq
    %v71 = vshrl.u32 %v70, 7
    %v72 = vsub.s32 0, %v71
    %v73 = vrot.slane %v68, %v72
    %v75 = vadd.f32 %v66, %v73
    %v76 = vadd.f32 %v67, %v73
    %v77 = vpack.c.bf16 %v76, %v75
    %v79 = vunpack.c.l.b16 %v77
    %v80 = vunpack.c.h.b16 %v77
    %v81 = vpack.c.b16 %v79, %v79
    %v82 = vpack.c.b16 %v80, %v80
    %vm85 = vcmask 257024
    %86 = vst.msk [vmem:[#allocation5] sm:$0xf] %vm85, %v81
    %87 = vst.msk [vmem:[#allocation5 + $0x4] sm:$0xf] %vm85, %v82
    // Predicated region
    $region18: #{tpu_custom_call.1} parent=1 // pred_check
      _
    $region19: #{tpu_custom_call.1} parent=1 // pred_check_branch
      %89 = sbr.rel (0) target = $region21
    $region20: #{tpu_custom_call.1} parent=1 // pred_region
      %s91 = ssub.s32 128, 128
      %92 = vsyncadd [#allocation4], %s91
      %s93 = sshll.u32 [#allocation5], 4
      %s94 = int_to_ptr.vmem [resolvable:$true] %s93
      %99 = dma.vmem_to_hbm [thread:$0]  %s94, 128, %s3, [#allocation4], 64, 64, 4
    $region21: #{tpu_custom_call.1} parent=1 // pred_fallthru
      _
    // Predicated region
    $region22: #{tpu_custom_call.1} parent=1 // pred_check
      _
    $region23: #{tpu_custom_call.1} parent=1 // pred_check_branch
      %101 = sbr.rel (0) target = $region25
    $region24: #{tpu_custom_call.1} parent=1 // pred_region
      %102 = dma.done [#allocation4], 128
    $region25: #{tpu_custom_call.1} parent=1 // pred_fallthru
      _
    %103 = vsyncpa [#allocation3], 1
    %104 = vsyncpa [#allocation4], 1

</llo_original>
